<compile_context>
chip_gen: v5e
topology: v5e:2x2
jax: 0.10.0
libtpu: 0.0.40
codegen_flags: <defaults>
</compile_context>

<pallas_src>
import functools

import jax
import jax.numpy as jnp
from jax.experimental import pallas as pl
from jax.experimental.pallas import tpu as pltpu

K = 10              # neighbours per query (self.k in the module)
_KPAD = 128         # lane-aligned width of the running top-k scratch / output
_BIG = 3.0e38       # "empty / already selected" sentinel (> any real distance)
_PAD_DIST = 1.0e30  # ||e||^2 assigned to padded table rows (never reaches top-k)


def _round_up(x, m):
    return (x + m - 1) // m * m


# ----------------------------------------------------------------------------
# Kernel 1: fused squared-L2 + running top-k over the table axis.
#   dist[t, n] = ||e[n]||^2 - 2 q[t].e[n]    (||q||^2 dropped: per-row shift,
#   rank-invariant for ids).  Running best-k (dist, idx) lives in VMEM scratch;
#   indices carried as f32 (exact for N < 2^24).
# ----------------------------------------------------------------------------
def _l2_topk_kernel(q_ref, e_ref, esq_ref, oid_ref, bestd_ref, besti_ref, *, k):
    ni = pl.program_id(1)

    @pl.when(ni == 0)
    def _():
        bestd_ref[...] = jnp.full_like(bestd_ref, _BIG)
        besti_ref[...] = jnp.zeros_like(besti_ref)

    # bf16 x bf16 -> f32 MXU matmul, contracting the last dim of both operands
    # (table tile is never transposed).
    cross = jax.lax.dot_general(
        q_ref[...], e_ref[...],
        dimension_numbers=(((1,), (1,)), ((), ())),
        preferred_element_type=jnp.float32)                      # (TT, TN)
    d = esq_ref[...] - 2.0 * cross                               # (TT, TN)

    # Early-out: only merge if some candidate beats the current per-row k-th
    # best.  After the first few tiles almost all tiles are skipped.
    hit = jnp.min(d - bestd_ref[:, k - 1:k]) < 0.0

    @pl.when(hit)
    def _merge():
        tt, tn = d.shape
        col = (jax.lax.broadcasted_iota(jnp.int32, d.shape, 1) + ni * tn
               ).astype(jnp.float32)                             # global col ids

        # Lane-aligned candidate set: running best (128 wide) ++ this tile.
        comb_d = jnp.concatenate([bestd_ref[...], d], axis=1)    # (TT, KPAD+TN)
        comb_i = jnp.concatenate([besti_ref[...], col], axis=1)

        new_d, new_i = [], []
        for _ in range(k):
            m = jnp.min(comb_d, axis=1, keepdims=True)           # (TT, 1)
            is_min = comb_d == m
            # tie-break on lowest global index (matches lax.top_k; faiss does
            # not strictly guarantee tie order).
            sel = jnp.min(jnp.where(is_min, comb_i, _BIG), axis=1, keepdims=True)
            new_d.append(m)
            new_i.append(sel)
            comb_d = jnp.where(is_min & (comb_i == sel), _BIG, comb_d)

        pad = bestd_ref.shape[1] - k
        # Single lane-dense 128-wide store per scratch buffer (no vst.msk).
        bestd_ref[...] = jnp.concatenate(
            new_d + [jnp.full((tt, pad), _BIG, jnp.float32)], axis=1)
        besti_ref[...] = jnp.concatenate(
            new_i + [jnp.zeros((tt, pad), jnp.float32)], axis=1)

    @pl.when(ni == pl.num_programs(1) - 1)
    def _():
        # Lane-dense output block (width 128); wrapper slices [:, :k].
        oid_ref[...] = besti_ref[...].astype(jnp.int32)


def l2_topk_ids(queries, table, k, *, max_query_tile=256, max_table_tile=2048):
    """Ids of the k nearest (squared-L2, ascending) table rows per query row.

    queries: (Q, Dp), table: (N, Dp); Dp must be a multiple of 128
    (zero-padded feature columns contribute nothing to the distances).
    """
    q_rows, d_p = queries.shape
    n_rows, _ = table.shape
    assert k <= _KPAD and n_rows >= k and d_p % 128 == 0

    # ||e||^2 once, in f32 (kept as a tiny (1, tn) input stream).
    e_sq = jnp.sum(table.astype(jnp.float32) ** 2, axis=-1)      # (N,)

    # Table (lane/reduction) tiling.
    if n_rows <= max_table_tile:
        tn = _round_up(n_rows, 128)
    else:
        tn = max_table_tile

    # Query (sublane/parallel) tiling; ensure >=2 tiles for megacore when the
    # query count allows it (v7x has 2 TensorCores sharded over this axis).
    tt = min(max_query_tile, _round_up(q_rows, 16))
    q_pad = _round_up(q_rows, tt)
    if q_pad // tt < 2 and q_pad >= 32:
        tt = _round_up(-(-q_pad // 2), 16)
        q_pad = _round_up(q_rows, tt)

    # VMEM budget including the compiler-visible f32 intermediates.
    def _vmem_bytes(tt_, tn_):
        return (2 * tt_ * d_p * 2              # query tile (bf16, double buf)
                + 2 * tn_ * d_p * 2            # table tile (bf16)
                + 2 * tn_ * 4                  # ||e||^2 tile
                + 2 * tt_ * _KPAD * 4          # ids output tile (int32)
                + 2 * tt_ * _KPAD * 4          # running top-k scratch
                + 2 * tt_ * tn_ * 4            # distance tile + column iota
                + 2 * tt_ * (_KPAD + tn_) * 4)  # comb_d + comb_i merge arrays

    while _vmem_bytes(tt, tn) > 36 * 1024 * 1024 and tn % 256 == 0 and tn > 256:
        tn //= 2
    n_pad = _round_up(n_rows, tn)
    assert n_pad < (1 << 24)  # f32-carried indices stay exact
    vmem_limit = min(40 * 1024 * 1024,
                     max(32 * 1024 * 1024, _vmem_bytes(tt, tn) + (4 << 20)))

    table_bf16 = jnp.pad(table.astype(jnp.bfloat16), ((0, n_pad - n_rows), (0, 0)))
    e_sq_pad = jnp.pad(e_sq, (0, n_pad - n_rows),
                       constant_values=_PAD_DIST)[None, :]        # (1, n_pad)
    q_bf16 = jnp.pad(queries.astype(jnp.bfloat16), ((0, q_pad - q_rows), (0, 0)))

    grid = (q_pad // tt, n_pad // tn)
    out = pl.pallas_call(
        functools.partial(_l2_topk_kernel, k=k),
        out_shape=jax.ShapeDtypeStruct((q_pad, _KPAD), jnp.int32),
        grid=grid,
        in_specs=[
            pl.BlockSpec((tt, d_p), lambda qi, ni: (qi, 0)),   # queries
            pl.BlockSpec((tn, d_p), lambda qi, ni: (ni, 0)),   # table tile
            pl.BlockSpec((1, tn), lambda qi, ni: (0, ni)),     # ||e||^2 tile
        ],
        out_specs=pl.BlockSpec((tt, _KPAD), lambda qi, ni: (qi, 0)),
        scratch_shapes=[
            pltpu.VMEM((tt, _KPAD), jnp.float32),              # best distances
            pltpu.VMEM((tt, _KPAD), jnp.float32),              # best indices
        ],
        compiler_params=pltpu.CompilerParams(
            dimension_semantics=("parallel", "arbitrary"),
            vmem_limit_bytes=vmem_limit,
        ),
    )(q_bf16, table_bf16, e_sq_pad)
    return out[:q_rows, :k]


# ----------------------------------------------------------------------------
# Kernel 2a: small-table gather fast path.
#   Table held resident in VMEM as (N, 1, D) row-tiles; ids in SMEM (scalar
#   prefetch); each grid step copies `rows` rows with dynamic leading-axis
#   reads and static stores into the pipelined output block.
# ----------------------------------------------------------------------------
def _gather_vmem_kernel(ids_ref, table_ref, out_ref, *, rows):
    base = pl.program_id(0) * rows
    for r in range(rows):                       # static unroll: static stores
        out_ref[r] = table_ref[ids_ref[base + r]]


def _gather_small(table, ids):
    m = ids.shape[0]
    n, d_p = table.shape
    rows = min(128, _round_up(m, 8))
    m_pad = _round_up(m, rows)
    ids_pad = jnp.pad(ids, (0, m_pad - m))
    table3 = table.reshape(n, 1, d_p)

    vmem_limit = min(40 * 1024 * 1024,
                     max(32 * 1024 * 1024,
                         n * 8 * d_p * 4 + 2 * rows * 8 * d_p * 4 + (4 << 20)))
    out = pl.pallas_call(
        functools.partial(_gather_vmem_kernel, rows=rows),
        out_shape=jax.ShapeDtypeStruct((m_pad, 1, d_p), table.dtype),
        grid_spec=pltpu.PrefetchScalarGridSpec(
            num_scalar_prefetch=1,
            grid=(m_pad // rows,),
            in_specs=[pl.BlockSpec((n, 1, d_p), lambda i, ids: (0, 0, 0))],
            out_specs=pl.BlockSpec((rows, 1, d_p), lambda i, ids: (i, 0, 0)),
        ),
        compiler_params=pltpu.CompilerParams(
            dimension_semantics=("parallel",),
            vmem_limit_bytes=vmem_limit,
        ),
    )(ids_pad, table3)
    return out.reshape(m_pad, d_p)[:m]


# ----------------------------------------------------------------------------
# Kernel 2b: large-table gather fallback.
#   Table stays in HBM (pl.ANY); `rows` in-flight row DMAs per grid step go
#   DIRECTLY into the pipelined output block (no intermediate VMEM buffer).
# ----------------------------------------------------------------------------
def _gather_dma_kernel(ids_ref, table_hbm, out_ref, sems, *, rows):
    base = pl.program_id(0) * rows

    @pl.loop(0, rows)
    def _start(r):
        pltpu.make_async_copy(
            table_hbm.at[ids_ref[base + r]], out_ref.at[r], sems.at[r]).start()

    @pl.loop(0, rows)
    def _finish(r):
        pltpu.make_async_copy(
            table_hbm.at[ids_ref[base + r]], out_ref.at[r], sems.at[r]).wait()


def _gather_dma(table, ids):
    m = ids.shape[0]
    _, d_p = table.shape
    rows = min(128, _round_up(m, 8))
    m_pad = _round_up(m, rows)
    ids_pad = jnp.pad(ids, (0, m_pad - m))

    out = pl.pallas_call(
        functools.partial(_gather_dma_kernel, rows=rows),
        out_shape=jax.ShapeDtypeStruct((m_pad, d_p), table.dtype),
        grid_spec=pltpu.PrefetchScalarGridSpec(
            num_scalar_prefetch=1,
            grid=(m_pad // rows,),
            in_specs=[pl.BlockSpec(memory_space=pl.ANY)],          # table in HBM
            out_specs=pl.BlockSpec((rows, d_p), lambda i, ids: (i, 0)),
            scratch_shapes=[pltpu.SemaphoreType.DMA((rows,))],
        ),
        compiler_params=pltpu.CompilerParams(
            dimension_semantics=("parallel",)),
    )(ids_pad, table)
    return out[:m]


def embedding_gather(table, ids, *, vmem_table_limit=12 * 1024 * 1024):
    """out[i, :] = table[ids[i], :]."""
    n, d_p = table.shape
    ids = ids.astype(jnp.int32)
    # (n, 1, d_p) layout pads each row to 8 sublanes in VMEM -> 8x bytes.
    if n * 8 * d_p * 4 <= vmem_table_limit:
        return _gather_small(table, ids)
    return _gather_dma(table, ids)


# ----------------------------------------------------------------------------
# Forward pass (mirrors PairwiseRanking.forward)
# ----------------------------------------------------------------------------
def pairwise_ranking_forward(emb, triplet_set, k=K):
    triplets = jnp.asarray(triplet_set, dtype=jnp.int32)            # (T, 3)
    t = triplets.shape[0]
    anchor_ids, pos_ids, neg_ids = triplets[:, 0], triplets[:, 1], triplets[:, 2]

    _, d = emb.shape
    d_pad = _round_up(d, 128)                                       # lane-align D
    emb_pad = jnp.pad(emb.astype(jnp.float32), ((0, 0), (0, d_pad - d)))

    # index.reconstruct(p/n): one batched gather for all query vectors.
    query_ids = jnp.concatenate([pos_ids, neg_ids])                 # (2T,)
    queries = embedding_gather(emb_pad, query_ids)                  # (2T, d_pad)

    # index.search(query, k): fused distance + top-k; pos & neg share one pass
    # over the table so the (N, D) table streams from HBM once.
    topk = l2_topk_ids(queries, emb_pad, k)                         # (2T, k)
    pos_topk = topk[:t]
    neg_topk = topk[t:]

    # nn.Embedding lookups: one gather for [anchors | pos ids | neg ids];
    # anchors are repeated k times afterwards instead of gathering duplicates.
    flat_ids = jnp.concatenate(
        [anchor_ids, pos_topk.reshape(-1), neg_topk.reshape(-1)])   # (T + 2*T*k,)
    gathered = embedding_gather(emb_pad, flat_ids)[:, :d]

    anchor_emb = jnp.repeat(gathered[:t], k, axis=0)                # (T*k, d)
    positive_emb = gathered[t:t + t * k]                            # (T*k, d)
    negative_emb = gathered[t + t * k:]                             # (T*k, d)
    return anchor_emb, positive_emb, negative_emb


if __name__ == "__main__":
    num_contents = 512
    embedding_dim = 128   # lane-aligned feature dim (padded internally anyway)

    # Deterministic synthetic "index" / embedding table (nn.Embedding weights
    # initialized from index.reconstruct(i) in the module).
    key = jax.random.PRNGKey(0)
    emb = jax.random.normal(key, (num_contents, embedding_dim), dtype=jnp.float32)

    # Small deterministic triplet set: (anchor_id, positive_id, negative_id)
    triplet_set = [(0, 1, 2), (3, 4, 5), (6, 7, 8), (9, 10, 11)]

    anchor_e, positive_e, negative_e = pairwise_ranking_forward(emb, triplet_set)
    jax.block_until_ready((anchor_e, positive_e, negative_e))

    T = len(triplet_set)
    assert anchor_e.shape == (T * K, embedding_dim)
    assert positive_e.shape == (T * K, embedding_dim)
    assert negative_e.shape == (T * K, embedding_dim)
    assert anchor_e.dtype == jnp.float32

    # Anchor rows are the anchor embedding repeated k times.
    assert bool(jnp.allclose(anchor_e[0], emb[triplet_set[0][0]]))
    assert bool(jnp.allclose(anchor_e[K - 1], emb[triplet_set[0][0]]))
    # Searching with reconstruct(p) must return p itself first (min distance),
    # so the first positive/negative embedding of triplet 0 is that exact row.
    assert bool(jnp.allclose(positive_e[0], emb[triplet_set[0][1]]))
    assert bool(jnp.allclose(negative_e[0], emb[triplet_set[0][2]]))

    print("KERNEL_OK")
</pallas_src>

<mosaic_0001>
module attributes {stable_mosaic.version = 11 : i64} {
  func.func @_gather_vmem_kernel(%arg0: i32, %arg1: memref<8xi32, #tpu.memory_space<smem>>, %arg2: memref<512x1x128xf32, #tpu.memory_space<vmem>>, %arg3: memref<8x1x128xf32, #tpu.memory_space<vmem>>) attributes {dimension_semantics = [#tpu.dimension_semantics<parallel>], iteration_bounds = array<i64: 1>, scalar_prefetch = 1 : i64, scratch_operands = 0 : i64, tpu.core_type = #tpu.core_type<tc>, window_params = [{pipeline_mode = #tpu.pipeline_mode<synchronous>, transform_indices = @transform_0, window_bounds = array<i64: 512, 1, 128>}, {transform_indices = @transform_1, window_bounds = array<i64: 8, 1, 128>}]} {
    %c8_i32 = arith.constant 8 : i32
    %0 = arith.muli %arg0, %c8_i32 : i32
    %c0_i32 = arith.constant 0 : i32
    %1 = arith.addi %0, %c0_i32 : i32
    %2 = arith.index_cast %1 : i32 to index
    %3 = memref.load %arg1[%2] : memref<8xi32, #tpu.memory_space<smem>>
    %4 = arith.index_cast %3 : i32 to index
    %c0 = arith.constant 0 : index
    %c0_0 = arith.constant 0 : index
    %5 = vector.load %arg2[%4, %c0, %c0_0] : memref<512x1x128xf32, #tpu.memory_space<vmem>>, vector<1x1x128xf32>
    %6 = vector.shape_cast %5 : vector<1x1x128xf32> to vector<1x128xf32>
    %c0_1 = arith.constant 0 : index
    %c0_2 = arith.constant 0 : index
    %c0_3 = arith.constant 0 : index
    %7 = vector.load %arg3[%c0_1, %c0_2, %c0_3] : memref<8x1x128xf32, #tpu.memory_space<vmem>>, vector<1x1x128xf32>
    %8 = vector.shape_cast %7 : vector<1x1x128xf32> to vector<1x128xf32>
    %9 = vector.shape_cast %6 : vector<1x128xf32> to vector<1x1x128xf32>
    tpu.vector_store %arg3[%c0_1, %c0_2, %c0_3], %9 {strides = array<i32>} : memref<8x1x128xf32, #tpu.memory_space<vmem>>, vector<1x1x128xf32>,
    %c1_i32 = arith.constant 1 : i32
    %10 = arith.addi %0, %c1_i32 : i32
    %11 = arith.index_cast %10 : i32 to index
    %12 = memref.load %arg1[%11] : memref<8xi32, #tpu.memory_space<smem>>
    %13 = arith.index_cast %12 : i32 to index
    %c0_4 = arith.constant 0 : index
    %c0_5 = arith.constant 0 : index
    %14 = vector.load %arg2[%13, %c0_4, %c0_5] : memref<512x1x128xf32, #tpu.memory_space<vmem>>, vector<1x1x128xf32>
    %15 = vector.shape_cast %14 : vector<1x1x128xf32> to vector<1x128xf32>
    %c1 = arith.constant 1 : index
    %c0_6 = arith.constant 0 : index
    %c0_7 = arith.constant 0 : index
    %16 = vector.load %arg3[%c1, %c0_6, %c0_7] : memref<8x1x128xf32, #tpu.memory_space<vmem>>, vector<1x1x128xf32>
    %17 = vector.shape_cast %16 : vector<1x1x128xf32> to vector<1x128xf32>
    %18 = vector.shape_cast %15 : vector<1x128xf32> to vector<1x1x128xf32>
    tpu.vector_store %arg3[%c1, %c0_6, %c0_7], %18 {strides = array<i32>} : memref<8x1x128xf32, #tpu.memory_space<vmem>>, vector<1x1x128xf32>,
    %c2_i32 = arith.constant 2 : i32
    %19 = arith.addi %0, %c2_i32 : i32
    %20 = arith.index_cast %19 : i32 to index
    %21 = memref.load %arg1[%20] : memref<8xi32, #tpu.memory_space<smem>>
    %22 = arith.index_cast %21 : i32 to index
    %c0_8 = arith.constant 0 : index
    %c0_9 = arith.constant 0 : index
    %23 = vector.load %arg2[%22, %c0_8, %c0_9] : memref<512x1x128xf32, #tpu.memory_space<vmem>>, vector<1x1x128xf32>
    %24 = vector.shape_cast %23 : vector<1x1x128xf32> to vector<1x128xf32>
    %c2 = arith.constant 2 : index
    %c0_10 = arith.constant 0 : index
    %c0_11 = arith.constant 0 : index
    %25 = vector.load %arg3[%c2, %c0_10, %c0_11] : memref<8x1x128xf32, #tpu.memory_space<vmem>>, vector<1x1x128xf32>
    %26 = vector.shape_cast %25 : vector<1x1x128xf32> to vector<1x128xf32>
    %27 = vector.shape_cast %24 : vector<1x128xf32> to vector<1x1x128xf32>
    tpu.vector_store %arg3[%c2, %c0_10, %c0_11], %27 {strides = array<i32>} : memref<8x1x128xf32, #tpu.memory_space<vmem>>, vector<1x1x128xf32>,
    %c3_i32 = arith.constant 3 : i32
    %28 = arith.addi %0, %c3_i32 : i32
    %29 = arith.index_cast %28 : i32 to index
    %30 = memref.load %arg1[%29] : memref<8xi32, #tpu.memory_space<smem>>
    %31 = arith.index_cast %30 : i32 to index
    %c0_12 = arith.constant 0 : index
    %c0_13 = arith.constant 0 : index
    %32 = vector.load %arg2[%31, %c0_12, %c0_13] : memref<512x1x128xf32, #tpu.memory_space<vmem>>, vector<1x1x128xf32>
    %33 = vector.shape_cast %32 : vector<1x1x128xf32> to vector<1x128xf32>
    %c3 = arith.constant 3 : index
    %c0_14 = arith.constant 0 : index
    %c0_15 = arith.constant 0 : index
    %34 = vector.load %arg3[%c3, %c0_14, %c0_15] : memref<8x1x128xf32, #tpu.memory_space<vmem>>, vector<1x1x128xf32>
    %35 = vector.shape_cast %34 : vector<1x1x128xf32> to vector<1x128xf32>
    %36 = vector.shape_cast %33 : vector<1x128xf32> to vector<1x1x128xf32>
    tpu.vector_store %arg3[%c3, %c0_14, %c0_15], %36 {strides = array<i32>} : memref<8x1x128xf32, #tpu.memory_space<vmem>>, vector<1x1x128xf32>,
    %c4_i32 = arith.constant 4 : i32
    %37 = arith.addi %0, %c4_i32 : i32
    %38 = arith.index_cast %37 : i32 to index
    %39 = memref.load %arg1[%38] : memref<8xi32, #tpu.memory_space<smem>>
    %40 = arith.index_cast %39 : i32 to index
    %c0_16 = arith.constant 0 : index
    %c0_17 = arith.constant 0 : index
    %41 = vector.load %arg2[%40, %c0_16, %c0_17] : memref<512x1x128xf32, #tpu.memory_space<vmem>>, vector<1x1x128xf32>
    %42 = vector.shape_cast %41 : vector<1x1x128xf32> to vector<1x128xf32>
    %c4 = arith.constant 4 : index
    %c0_18 = arith.constant 0 : index
    %c0_19 = arith.constant 0 : index
    %43 = vector.load %arg3[%c4, %c0_18, %c0_19] : memref<8x1x128xf32, #tpu.memory_space<vmem>>, vector<1x1x128xf32>
    %44 = vector.shape_cast %43 : vector<1x1x128xf32> to vector<1x128xf32>
    %45 = vector.shape_cast %42 : vector<1x128xf32> to vector<1x1x128xf32>
    tpu.vector_store %arg3[%c4, %c0_18, %c0_19], %45 {strides = array<i32>} : memref<8x1x128xf32, #tpu.memory_space<vmem>>, vector<1x1x128xf32>,
    %c5_i32 = arith.constant 5 : i32
    %46 = arith.addi %0, %c5_i32 : i32
    %47 = arith.index_cast %46 : i32 to index
    %48 = memref.load %arg1[%47] : memref<8xi32, #tpu.memory_space<smem>>
    %49 = arith.index_cast %48 : i32 to index
    %c0_20 = arith.constant 0 : index
    %c0_21 = arith.constant 0 : index
    %50 = vector.load %arg2[%49, %c0_20, %c0_21] : memref<512x1x128xf32, #tpu.memory_space<vmem>>, vector<1x1x128xf32>
    %51 = vector.shape_cast %50 : vector<1x1x128xf32> to vector<1x128xf32>
    %c5 = arith.constant 5 : index
    %c0_22 = arith.constant 0 : index
    %c0_23 = arith.constant 0 : index
    %52 = vector.load %arg3[%c5, %c0_22, %c0_23] : memref<8x1x128xf32, #tpu.memory_space<vmem>>, vector<1x1x128xf32>
    %53 = vector.shape_cast %52 : vector<1x1x128xf32> to vector<1x128xf32>
    %54 = vector.shape_cast %51 : vector<1x128xf32> to vector<1x1x128xf32>
    tpu.vector_store %arg3[%c5, %c0_22, %c0_23], %54 {strides = array<i32>} : memref<8x1x128xf32, #tpu.memory_space<vmem>>, vector<1x1x128xf32>,
    %c6_i32 = arith.constant 6 : i32
    %55 = arith.addi %0, %c6_i32 : i32
    %56 = arith.index_cast %55 : i32 to index
    %57 = memref.load %arg1[%56] : memref<8xi32, #tpu.memory_space<smem>>
    %58 = arith.index_cast %57 : i32 to index
    %c0_24 = arith.constant 0 : index
    %c0_25 = arith.constant 0 : index
    %59 = vector.load %arg2[%58, %c0_24, %c0_25] : memref<512x1x128xf32, #tpu.memory_space<vmem>>, vector<1x1x128xf32>
    %60 = vector.shape_cast %59 : vector<1x1x128xf32> to vector<1x128xf32>
    %c6 = arith.constant 6 : index
    %c0_26 = arith.constant 0 : index
    %c0_27 = arith.constant 0 : index
    %61 = vector.load %arg3[%c6, %c0_26, %c0_27] : memref<8x1x128xf32, #tpu.memory_space<vmem>>, vector<1x1x128xf32>
    %62 = vector.shape_cast %61 : vector<1x1x128xf32> to vector<1x128xf32>
    %63 = vector.shape_cast %60 : vector<1x128xf32> to vector<1x1x128xf32>
    tpu.vector_store %arg3[%c6, %c0_26, %c0_27], %63 {strides = array<i32>} : memref<8x1x128xf32, #tpu.memory_space<vmem>>, vector<1x1x128xf32>,
    %c7_i32 = arith.constant 7 : i32
    %64 = arith.addi %0, %c7_i32 : i32
    %65 = arith.index_cast %64 : i32 to index
    %66 = memref.load %arg1[%65] : memref<8xi32, #tpu.memory_space<smem>>
    %67 = arith.index_cast %66 : i32 to index
    %c0_28 = arith.constant 0 : index
    %c0_29 = arith.constant 0 : index
    %68 = vector.load %arg2[%67, %c0_28, %c0_29] : memref<512x1x128xf32, #tpu.memory_space<vmem>>, vector<1x1x128xf32>
    %69 = vector.shape_cast %68 : vector<1x1x128xf32> to vector<1x128xf32>
    %c7 = arith.constant 7 : index
    %c0_30 = arith.constant 0 : index
    %c0_31 = arith.constant 0 : index
    %70 = vector.load %arg3[%c7, %c0_30, %c0_31] : memref<8x1x128xf32, #tpu.memory_space<vmem>>, vector<1x1x128xf32>
    %71 = vector.shape_cast %70 : vector<1x1x128xf32> to vector<1x128xf32>
    %72 = vector.shape_cast %69 : vector<1x128xf32> to vector<1x1x128xf32>
    tpu.vector_store %arg3[%c7, %c0_30, %c0_31], %72 {strides = array<i32>} : memref<8x1x128xf32, #tpu.memory_space<vmem>>, vector<1x1x128xf32>,
    return
  }
  func.func @transform_0(%arg0: i32, %arg1: memref<8xi32, #tpu.memory_space<smem>>) -> (i32, i32, i32) {
    %c0_i32 = arith.constant 0 : i32
    %c0_i32_0 = arith.constant 0 : i32
    %c0_i32_1 = arith.constant 0 : i32
    %c0_i32_2 = arith.constant 0 : i32
    return %c0_i32, %c0_i32_0, %c0_i32_1 : i32, i32, i32
  }
  func.func @transform_1(%arg0: i32, %arg1: memref<8xi32, #tpu.memory_space<smem>>) -> (i32, i32, i32) {
    %c0_i32 = arith.constant 0 : i32
    %c0_i32_0 = arith.constant 0 : i32
    %c0_i32_1 = arith.constant 0 : i32
    return %arg0, %c0_i32, %c0_i32_0 : i32, i32, i32
  }
}

</mosaic_0001>

<llo_original>
// kernel: tpu_custom_call.1
$region0: #{tpu_custom_call.1}
  #allocation0 [shape = 'u32[]', space=smem, size = 0x4, offset = 0x4, fixed_abs, tag = 'smem constant byte address 0x4 - core index']
  #allocation1 [shape = 'u32[72,128]{1,0:T(1,128)}', space=vmem, size = 0x9000, scoped, tag = 'internal scratch']
  #allocation2 [shape = 's32[1]{0}', space=sflag, size = 0x4, scoped, tag = 'scoped memory for tpu_custom_call.1']
  #allocation3 [shape = 'u8[512]{0}', space=smem, size = 0x200, scoped, tag = 'prefetched SMEM operand 0']
  %s0 = inlined_call_operand.hbm [shape: s32[8], index: 0, kind: input, shape index: {}]
  %s1 = inlined_call_operand.hbm [shape: f32[512,1,128], index: 1, kind: input, shape index: {}]
  %s2 = inlined_call_operand.hbm [shape: f32[8,1,128], index: 2, kind: output, shape index: {}]
  %s3 = sld [smem:[#allocation0]]
  $region18: #{tpu_custom_call.1} parent=0
    _
  %s5 = ssub.s32 1, %s3
  %s6 = scalar_select 0, %s5, %s3
  %s8 = sshll.u32 %s0, 4
  %s9 = int_to_ptr.hbm [resolvable:$true] %s8
  %11 = dma.hbm_to_smem %s9, 16, [#allocation3], [#allocation2]
  %13 = dma.done [#allocation2], 16
  %14 = sfence
  $region1: #{tpu_custom_call.1} parent=0
    #allocation4 [shape = 'u8[262144]{0}', space=vmem, size = 0x40000, scoped, tag = 'input window, operand 1, single buffered']
    #allocation5 [shape = 's32[1]{0}', space=sflag, size = 0x4, scoped, tag = 'scoped memory for tpu_custom_call.1']
    #allocation6 [shape = 's32[1]{0}', space=sflag, size = 0x4, scoped, tag = 'scoped memory for tpu_custom_call.1']
    #allocation7 [shape = 'u8[4096]{0}', space=vmem, size = 0x1000, scoped, tag = 'output window, operand 0, single buffered']
    %15 = vsyncpa [#allocation5], 0
    %16 = vsyncpa [#allocation6], 0
    // Predicated region
    $region2: #{tpu_custom_call.1} parent=1 // pred_check
      _
    $region3: #{tpu_custom_call.1} parent=1 // pred_check_branch
      %18 = sbr.rel (0) target = $region5
    $region4: #{tpu_custom_call.1} parent=1 // pred_region
      %20 = vsyncadd [#allocation5], 0
      %s21 = sshll.u32 %s1, 4
      %s22 = int_to_ptr.hbm [resolvable:$true] %s21
      %s23 = sshll.u32 [#allocation4], 4
      %s24 = int_to_ptr.vmem [resolvable:$true] %s23
      %29 = dma.hbm_to_vmem [thread:$0]  %s22, 8192, %s24, [#allocation5], 16, 16, 1
    $region5: #{tpu_custom_call.1} parent=1 // pred_fallthru
      _
    // Predicated region
    $region6: #{tpu_custom_call.1} parent=1 // pred_check
      _
    $region7: #{tpu_custom_call.1} parent=1 // pred_check_branch
      %31 = sbr.rel (0) target = $region9
    $region8: #{tpu_custom_call.1} parent=1 // pred_region
      %33 = dma.done [#allocation5], 8192
    $region9: #{tpu_custom_call.1} parent=1 // pred_fallthru
      _
    %s34 = smul.u32 0, 8
    %s35 = sld [smem:[#allocation3 + %s34]]
    %s36 = scalar_lea.vmem [#allocation4], %s35
    %v37 = vld [vmem:[%s36] sm:$0x1]
    %38 = vst [vmem:[#allocation7] sm:$0x1] %v37
    %s39 = sadd.s32 %s34, 1
    %s40 = sld [smem:[#allocation3 + %s39]]
    %s41 = scalar_lea.vmem [#allocation4], %s40
    %v42 = vld [vmem:[%s41] sm:$0x1]
    %s43 = scalar_lea.vmem [#allocation7], 1
    %44 = vst [vmem:[%s43] sm:$0x1] %v42
    %s45 = sadd.s32 %s34, 2
    %s46 = sld [smem:[#allocation3 + %s45]]
    %s47 = scalar_lea.vmem [#allocation4], %s46
    %v48 = vld [vmem:[%s47] sm:$0x1]
    %s49 = scalar_lea.vmem [#allocation7], 2
    %50 = vst [vmem:[%s49] sm:$0x1] %v48
    %s51 = sadd.s32 %s34, 3
    %s52 = sld [smem:[#allocation3 + %s51]]
    %s53 = scalar_lea.vmem [#allocation4], %s52
    %v54 = vld [vmem:[%s53] sm:$0x1]
    %s55 = scalar_lea.vmem [#allocation7], 3
    %56 = vst [vmem:[%s55] sm:$0x1] %v54
    %s57 = sadd.s32 %s34, 4
    %s58 = sld [smem:[#allocation3 + %s57]]
    %s59 = scalar_lea.vmem [#allocation4], %s58
    %v60 = vld [vmem:[%s59] sm:$0x1]
    %s61 = scalar_lea.vmem [#allocation7], 4
    %62 = vst [vmem:[%s61] sm:$0x1] %v60
    %s63 = sadd.s32 %s34, 5
    %s64 = sld [smem:[#allocation3 + %s63]]
    %s65 = scalar_lea.vmem [#allocation4], %s64
    %v66 = vld [vmem:[%s65] sm:$0x1]
    %s67 = scalar_lea.vmem [#allocation7], 5
    %68 = vst [vmem:[%s67] sm:$0x1] %v66
    %s69 = sadd.s32 %s34, 6
    %s70 = sld [smem:[#allocation3 + %s69]]
    %s71 = scalar_lea.vmem [#allocation4], %s70
    %v72 = vld [vmem:[%s71] sm:$0x1]
    %s73 = scalar_lea.vmem [#allocation7], 6
    %74 = vst [vmem:[%s73] sm:$0x1] %v72
    %s75 = sadd.s32 %s34, 7
    %s76 = sld [smem:[#allocation3 + %s75]]
    %s77 = scalar_lea.vmem [#allocation4], %s76
    %v78 = vld [vmem:[%s77] sm:$0x1]
    %s79 = scalar_lea.vmem [#allocation7], 7
    %80 = vst [vmem:[%s79] sm:$0x1] %v78
    // Predicated region
    $region10: #{tpu_custom_call.1} parent=1 // pred_check
      _
    $region11: #{tpu_custom_call.1} parent=1 // pred_check_branch
      %82 = sbr.rel (0) target = $region13
    $region12: #{tpu_custom_call.1} parent=1 // pred_region
      %84 = vsyncadd [#allocation6], 0
      %s85 = sshll.u32 [#allocation7], 4
      %s86 = int_to_ptr.vmem [resolvable:$true] %s85
      %s87 = sshll.u32 %s2, 4
      %s88 = int_to_ptr.hbm [resolvable:$true] %s87
      %93 = dma.vmem_to_hbm [thread:$0]  %s86, 128, %s88, [#allocation6], 16, 16, 1
    $region13: #{tpu_custom_call.1} parent=1 // pred_fallthru
      _
    // Predicated region
    $region14: #{tpu_custom_call.1} parent=1 // pred_check
      _
    $region15: #{tpu_custom_call.1} parent=1 // pred_check_branch
      %95 = sbr.rel (0) target = $region17
    $region16: #{tpu_custom_call.1} parent=1 // pred_region
      %97 = dma.done [#allocation6], 128
    $region17: #{tpu_custom_call.1} parent=1 // pred_fallthru
      _
    %98 = vsyncpa [#allocation5], 1
    %99 = vsyncpa [#allocation6], 1

</llo_original>
